<compile_context>
chip_gen: v6e
topology: v6e:2x2x1
jax: 0.10.0
libtpu: 0.0.40
codegen_flags: <defaults>
</compile_context>

<pallas_src>
import functools

import jax
import jax.numpy as jnp
from jax.experimental import pallas as pl
from jax.experimental.pallas import tpu as pltpu


def _freq_attn_kernel(x_ref, a_ref, c_ref, pc_ref, o_ref, *,
                      hidden, compute_dtype):
    x = x_ref[...]                                  # (TM, 128), input dtype
    x32 = x.astype(jnp.float32)
    xc = x.astype(compute_dtype)                    # no-op for f32 default

    # Affine part of the logit, P*x + (Q + b2), folded into the accumulator
    # init so the epilogue is just the sigmoid.
    acc0 = pc_ref[0] * x32 + pc_ref[1]

    def body(h, acc):
        # Scalar loads from SMEM -> hardware splats sreg -> vreg.
        a = a_ref[h].astype(compute_dtype)          # 0.5 * w2_h * |w1_h|
        c = c_ref[h].astype(compute_dtype)          # b1_h / w1_h
        t = jnp.abs(xc + c)                         # |x + b1/w1|  (2 VALU ops)
        return acc + (a * t).astype(jnp.float32)    # mul + add  -> 4 ops / h

    logit = jax.lax.fori_loop(0, hidden, body, acc0, unroll=True)

    # sigmoid: exp on the EUP, exact reciprocal (once per element).
    # TODO(synk): approx=True would move the divide fully onto the EUP at the
    # cost of ~1e-3-level accuracy in attn.
    attn = pl.reciprocal(1.0 + jnp.exp(-logit))
    o_ref[...] = (x32 * attn).astype(o_ref.dtype)


def frequency_attention(x, w1, b1, w2, b2, *, tm=512,
                        compute_dtype=jnp.float32):
    """FrequencyAttention forward.

    x:  (b, t, c, f) with c == 1 (Conv1d in_channels=1).
    w1/b1/w2: arrays with H elements (any layout, e.g. PyTorch (H,1,1)/(H,)).
    b2: single-element array.
    tm: rows of 128 lanes per grid step (sweep 256-1024 for production shapes).
    compute_dtype: jnp.float32 (default, v5e-safe) or jnp.bfloat16 (v6e/v7x).
    """
    b, t, c, f = x.shape
    assert c == 1, "Conv1d(in_channels=1) requires the channel dim to be 1"

    w1f = w1.reshape(-1).astype(jnp.float32)
    b1f = b1.reshape(-1).astype(jnp.float32)
    w2f = w2.reshape(-1).astype(jnp.float32)
    b2s = b2.reshape(-1).astype(jnp.float32)[0]
    hidden = int(w1f.size)

    # Host-side refactor:  w2*relu(w1*x + b1) = 0.5*w2*(w1*x+b1) + 0.5*w2*|w1*x+b1|
    #   => logit = P*x + K + sum_h A_h * |x + C_h|
    # Channels with (near-)zero w1 contribute the constant w2*relu(b1) exactly.
    active = jnp.abs(w1f) > jnp.float32(1e-30)
    safe_w1 = jnp.where(active, w1f, jnp.float32(1.0))
    a_h = jnp.where(active, 0.5 * w2f * jnp.abs(w1f), 0.0)        # (H,)
    c_h = jnp.where(active, b1f / safe_w1, 0.0)                   # (H,)
    p = jnp.sum(jnp.where(active, 0.5 * w2f * w1f, 0.0))
    q = jnp.sum(jnp.where(active, 0.5 * w2f * b1f,
                          w2f * jnp.maximum(b1f, 0.0)))
    pc = jnp.stack([p, q + b2s]).astype(jnp.float32)              # (2,) in SMEM

    lanes = 128
    n_total = b * t * c * f
    rows = pl.cdiv(n_total, lanes)
    # Row tile: multiple of 8 sublanes, capped at what the problem needs.
    tm_rounded = max(8, (tm // 8) * 8)
    tm_eff = min(tm_rounded, ((rows + 7) // 8) * 8)
    rows_padded = pl.cdiv(rows, tm_eff) * tm_eff
    n_padded = rows_padded * lanes

    # Explicit zero padding: padded lanes flow through the elementwise math
    # harmlessly (0 * attn = 0) and are sliced off afterwards.
    x_flat = x.reshape(-1)
    if n_padded != n_total:
        x_flat = jnp.pad(x_flat, (0, n_padded - n_total))
    x2 = x_flat.reshape(rows_padded, lanes)

    kernel = functools.partial(_freq_attn_kernel, hidden=hidden,
                               compute_dtype=compute_dtype)
    out2 = pl.pallas_call(
        kernel,
        out_shape=jax.ShapeDtypeStruct((rows_padded, lanes), x.dtype),
        grid=(rows_padded // tm_eff,),
        in_specs=[
            pl.BlockSpec((tm_eff, lanes), lambda i: (i, 0)),      # x tile (VMEM)
            pl.BlockSpec(memory_space=pltpu.MemorySpace.SMEM),    # A (H,)
            pl.BlockSpec(memory_space=pltpu.MemorySpace.SMEM),    # C (H,)
            pl.BlockSpec(memory_space=pltpu.MemorySpace.SMEM),    # [P, Q+b2]
        ],
        out_specs=pl.BlockSpec((tm_eff, lanes), lambda i: (i, 0)),
        compiler_params=pltpu.CompilerParams(
            dimension_semantics=("parallel",),   # megacore-shardable
            vmem_limit_bytes=32 * 1024 * 1024,
        ),
    )(x2, a_h, c_h, pc)

    return out2.reshape(-1)[:n_total].reshape(b, t, c, f)


def frequency_attention_ref(x, w1, b1, w2, b2):
    # Pure-JAX reference of the PyTorch forward (naive formulation).
    w1f = w1.reshape(-1)
    b1f = b1.reshape(-1)
    w2f = w2.reshape(-1)
    b2f = b2.reshape(-1)
    h = jnp.maximum(x[..., None] * w1f + b1f, 0.0)        # (b,t,c,f,H)
    logit = jnp.sum(h * w2f, axis=-1) + b2f[0]
    return x * jax.nn.sigmoid(logit)


if __name__ == "__main__":
    b, t, c, f = 2, 8, 1, 16     # c must be 1 (Conv1d in_channels=1)
    hidden = 32

    key = jax.random.PRNGKey(0)
    kx, k1, k2, k3, k4 = jax.random.split(key, 5)

    x = jax.random.normal(kx, (b, t, c, f), dtype=jnp.float32)
    # Conv1d(1, H, 1): weight (H, 1, 1), bias (H,)
    w1 = jax.random.normal(k1, (hidden, 1, 1), dtype=jnp.float32) * 0.5
    b1 = jax.random.normal(k2, (hidden,), dtype=jnp.float32) * 0.1
    # Conv1d(H, 1, 1): weight (1, H, 1), bias (1,)
    w2 = jax.random.normal(k3, (1, hidden, 1), dtype=jnp.float32) * 0.5
    b2 = jax.random.normal(k4, (1,), dtype=jnp.float32) * 0.1

    y = frequency_attention(x, w1, b1, w2, b2)
    y = jax.block_until_ready(y)

    y_ref = frequency_attention_ref(x, w1, b1, w2, b2)
    assert y.shape == x.shape
    assert jnp.allclose(y, y_ref, atol=1e-4, rtol=1e-4), \
        float(jnp.max(jnp.abs(y - y_ref)))

    print("KERNEL_OK")
</pallas_src>

<mosaic_0001>
module attributes {stable_mosaic.version = 11 : i64} {
  func.func @_freq_attn_kernel(%arg0: i32, %arg1: memref<8x128xf32, #tpu.memory_space<vmem>>, %arg2: memref<32xf32, #tpu.memory_space<smem>>, %arg3: memref<32xf32, #tpu.memory_space<smem>>, %arg4: memref<2xf32, #tpu.memory_space<smem>>, %arg5: memref<8x128xf32, #tpu.memory_space<vmem>>) attributes {dimension_semantics = [#tpu.dimension_semantics<parallel>], iteration_bounds = array<i64: 1>, scalar_prefetch = 0 : i64, scratch_operands = 0 : i64, tpu.core_type = #tpu.core_type<tc>, window_params = [{transform_indices = @transform_0, window_bounds = array<i64: 8, 128>}, {transform_indices = @transform_1, window_bounds = array<i64: 32>}, {transform_indices = @transform_2, window_bounds = array<i64: 32>}, {transform_indices = @transform_3, window_bounds = array<i64: 2>}, {transform_indices = @transform_4, window_bounds = array<i64: 8, 128>}]} {
    %c0 = arith.constant 0 : index
    %c0_0 = arith.constant 0 : index
    %0 = vector.load %arg1[%c0, %c0_0] : memref<8x128xf32, #tpu.memory_space<vmem>>, vector<8x128xf32>
    %c0_1 = arith.constant 0 : index
    %1 = memref.load %arg4[%c0_1] : memref<2xf32, #tpu.memory_space<smem>>
    %2 = vector.broadcast %1 : f32 to vector<8x128xf32>
    %3 = arith.mulf %2, %0 : vector<8x128xf32>
    %c1 = arith.constant 1 : index
    %4 = memref.load %arg4[%c1] : memref<2xf32, #tpu.memory_space<smem>>
    %5 = vector.broadcast %4 : f32 to vector<8x128xf32>
    %6 = arith.addf %3, %5 : vector<8x128xf32>
    %c0_i32 = arith.constant 0 : i32
    %7 = arith.index_cast %c0_i32 : i32 to index
    %8 = memref.load %arg2[%7] : memref<32xf32, #tpu.memory_space<smem>>
    %9 = arith.index_cast %c0_i32 : i32 to index
    %10 = memref.load %arg3[%9] : memref<32xf32, #tpu.memory_space<smem>>
    %11 = vector.broadcast %10 : f32 to vector<8x128xf32>
    %12 = arith.addf %0, %11 : vector<8x128xf32>
    %13 = math.absf %12 : vector<8x128xf32>
    %14 = vector.broadcast %8 : f32 to vector<8x128xf32>
    %15 = arith.mulf %14, %13 : vector<8x128xf32>
    %16 = arith.addf %6, %15 : vector<8x128xf32>
    %c1_i32 = arith.constant 1 : i32
    %17 = arith.index_cast %c1_i32 : i32 to index
    %18 = memref.load %arg2[%17] : memref<32xf32, #tpu.memory_space<smem>>
    %19 = arith.index_cast %c1_i32 : i32 to index
    %20 = memref.load %arg3[%19] : memref<32xf32, #tpu.memory_space<smem>>
    %21 = vector.broadcast %20 : f32 to vector<8x128xf32>
    %22 = arith.addf %0, %21 : vector<8x128xf32>
    %23 = math.absf %22 : vector<8x128xf32>
    %24 = vector.broadcast %18 : f32 to vector<8x128xf32>
    %25 = arith.mulf %24, %23 : vector<8x128xf32>
    %26 = arith.addf %16, %25 : vector<8x128xf32>
    %c2_i32 = arith.constant 2 : i32
    %27 = arith.index_cast %c2_i32 : i32 to index
    %28 = memref.load %arg2[%27] : memref<32xf32, #tpu.memory_space<smem>>
    %29 = arith.index_cast %c2_i32 : i32 to index
    %30 = memref.load %arg3[%29] : memref<32xf32, #tpu.memory_space<smem>>
    %31 = vector.broadcast %30 : f32 to vector<8x128xf32>
    %32 = arith.addf %0, %31 : vector<8x128xf32>
    %33 = math.absf %32 : vector<8x128xf32>
    %34 = vector.broadcast %28 : f32 to vector<8x128xf32>
    %35 = arith.mulf %34, %33 : vector<8x128xf32>
    %36 = arith.addf %26, %35 : vector<8x128xf32>
    %c3_i32 = arith.constant 3 : i32
    %37 = arith.index_cast %c3_i32 : i32 to index
    %38 = memref.load %arg2[%37] : memref<32xf32, #tpu.memory_space<smem>>
    %39 = arith.index_cast %c3_i32 : i32 to index
    %40 = memref.load %arg3[%39] : memref<32xf32, #tpu.memory_space<smem>>
    %41 = vector.broadcast %40 : f32 to vector<8x128xf32>
    %42 = arith.addf %0, %41 : vector<8x128xf32>
    %43 = math.absf %42 : vector<8x128xf32>
    %44 = vector.broadcast %38 : f32 to vector<8x128xf32>
    %45 = arith.mulf %44, %43 : vector<8x128xf32>
    %46 = arith.addf %36, %45 : vector<8x128xf32>
    %c4_i32 = arith.constant 4 : i32
    %47 = arith.index_cast %c4_i32 : i32 to index
    %48 = memref.load %arg2[%47] : memref<32xf32, #tpu.memory_space<smem>>
    %49 = arith.index_cast %c4_i32 : i32 to index
    %50 = memref.load %arg3[%49] : memref<32xf32, #tpu.memory_space<smem>>
    %51 = vector.broadcast %50 : f32 to vector<8x128xf32>
    %52 = arith.addf %0, %51 : vector<8x128xf32>
    %53 = math.absf %52 : vector<8x128xf32>
    %54 = vector.broadcast %48 : f32 to vector<8x128xf32>
    %55 = arith.mulf %54, %53 : vector<8x128xf32>
    %56 = arith.addf %46, %55 : vector<8x128xf32>
    %c5_i32 = arith.constant 5 : i32
    %57 = arith.index_cast %c5_i32 : i32 to index
    %58 = memref.load %arg2[%57] : memref<32xf32, #tpu.memory_space<smem>>
    %59 = arith.index_cast %c5_i32 : i32 to index
    %60 = memref.load %arg3[%59] : memref<32xf32, #tpu.memory_space<smem>>
    %61 = vector.broadcast %60 : f32 to vector<8x128xf32>
    %62 = arith.addf %0, %61 : vector<8x128xf32>
    %63 = math.absf %62 : vector<8x128xf32>
    %64 = vector.broadcast %58 : f32 to vector<8x128xf32>
    %65 = arith.mulf %64, %63 : vector<8x128xf32>
    %66 = arith.addf %56, %65 : vector<8x128xf32>
    %c6_i32 = arith.constant 6 : i32
    %67 = arith.index_cast %c6_i32 : i32 to index
    %68 = memref.load %arg2[%67] : memref<32xf32, #tpu.memory_space<smem>>
    %69 = arith.index_cast %c6_i32 : i32 to index
    %70 = memref.load %arg3[%69] : memref<32xf32, #tpu.memory_space<smem>>
    %71 = vector.broadcast %70 : f32 to vector<8x128xf32>
    %72 = arith.addf %0, %71 : vector<8x128xf32>
    %73 = math.absf %72 : vector<8x128xf32>
    %74 = vector.broadcast %68 : f32 to vector<8x128xf32>
    %75 = arith.mulf %74, %73 : vector<8x128xf32>
    %76 = arith.addf %66, %75 : vector<8x128xf32>
    %c7_i32 = arith.constant 7 : i32
    %77 = arith.index_cast %c7_i32 : i32 to index
    %78 = memref.load %arg2[%77] : memref<32xf32, #tpu.memory_space<smem>>
    %79 = arith.index_cast %c7_i32 : i32 to index
    %80 = memref.load %arg3[%79] : memref<32xf32, #tpu.memory_space<smem>>
    %81 = vector.broadcast %80 : f32 to vector<8x128xf32>
    %82 = arith.addf %0, %81 : vector<8x128xf32>
    %83 = math.absf %82 : vector<8x128xf32>
    %84 = vector.broadcast %78 : f32 to vector<8x128xf32>
    %85 = arith.mulf %84, %83 : vector<8x128xf32>
    %86 = arith.addf %76, %85 : vector<8x128xf32>
    %c8_i32 = arith.constant 8 : i32
    %87 = arith.index_cast %c8_i32 : i32 to index
    %88 = memref.load %arg2[%87] : memref<32xf32, #tpu.memory_space<smem>>
    %89 = arith.index_cast %c8_i32 : i32 to index
    %90 = memref.load %arg3[%89] : memref<32xf32, #tpu.memory_space<smem>>
    %91 = vector.broadcast %90 : f32 to vector<8x128xf32>
    %92 = arith.addf %0, %91 : vector<8x128xf32>
    %93 = math.absf %92 : vector<8x128xf32>
    %94 = vector.broadcast %88 : f32 to vector<8x128xf32>
    %95 = arith.mulf %94, %93 : vector<8x128xf32>
    %96 = arith.addf %86, %95 : vector<8x128xf32>
    %c9_i32 = arith.constant 9 : i32
    %97 = arith.index_cast %c9_i32 : i32 to index
    %98 = memref.load %arg2[%97] : memref<32xf32, #tpu.memory_space<smem>>
    %99 = arith.index_cast %c9_i32 : i32 to index
    %100 = memref.load %arg3[%99] : memref<32xf32, #tpu.memory_space<smem>>
    %101 = vector.broadcast %100 : f32 to vector<8x128xf32>
    %102 = arith.addf %0, %101 : vector<8x128xf32>
    %103 = math.absf %102 : vector<8x128xf32>
    %104 = vector.broadcast %98 : f32 to vector<8x128xf32>
    %105 = arith.mulf %104, %103 : vector<8x128xf32>
    %106 = arith.addf %96, %105 : vector<8x128xf32>
    %c10_i32 = arith.constant 10 : i32
    %107 = arith.index_cast %c10_i32 : i32 to index
    %108 = memref.load %arg2[%107] : memref<32xf32, #tpu.memory_space<smem>>
    %109 = arith.index_cast %c10_i32 : i32 to index
    %110 = memref.load %arg3[%109] : memref<32xf32, #tpu.memory_space<smem>>
    %111 = vector.broadcast %110 : f32 to vector<8x128xf32>
    %112 = arith.addf %0, %111 : vector<8x128xf32>
    %113 = math.absf %112 : vector<8x128xf32>
    %114 = vector.broadcast %108 : f32 to vector<8x128xf32>
    %115 = arith.mulf %114, %113 : vector<8x128xf32>
    %116 = arith.addf %106, %115 : vector<8x128xf32>
    %c11_i32 = arith.constant 11 : i32
    %117 = arith.index_cast %c11_i32 : i32 to index
    %118 = memref.load %arg2[%117] : memref<32xf32, #tpu.memory_space<smem>>
    %119 = arith.index_cast %c11_i32 : i32 to index
    %120 = memref.load %arg3[%119] : memref<32xf32, #tpu.memory_space<smem>>
    %121 = vector.broadcast %120 : f32 to vector<8x128xf32>
    %122 = arith.addf %0, %121 : vector<8x128xf32>
    %123 = math.absf %122 : vector<8x128xf32>
    %124 = vector.broadcast %118 : f32 to vector<8x128xf32>
    %125 = arith.mulf %124, %123 : vector<8x128xf32>
    %126 = arith.addf %116, %125 : vector<8x128xf32>
    %c12_i32 = arith.constant 12 : i32
    %127 = arith.index_cast %c12_i32 : i32 to index
    %128 = memref.load %arg2[%127] : memref<32xf32, #tpu.memory_space<smem>>
    %129 = arith.index_cast %c12_i32 : i32 to index
    %130 = memref.load %arg3[%129] : memref<32xf32, #tpu.memory_space<smem>>
    %131 = vector.broadcast %130 : f32 to vector<8x128xf32>
    %132 = arith.addf %0, %131 : vector<8x128xf32>
    %133 = math.absf %132 : vector<8x128xf32>
    %134 = vector.broadcast %128 : f32 to vector<8x128xf32>
    %135 = arith.mulf %134, %133 : vector<8x128xf32>
    %136 = arith.addf %126, %135 : vector<8x128xf32>
    %c13_i32 = arith.constant 13 : i32
    %137 = arith.index_cast %c13_i32 : i32 to index
    %138 = memref.load %arg2[%137] : memref<32xf32, #tpu.memory_space<smem>>
    %139 = arith.index_cast %c13_i32 : i32 to index
    %140 = memref.load %arg3[%139] : memref<32xf32, #tpu.memory_space<smem>>
    %141 = vector.broadcast %140 : f32 to vector<8x128xf32>
    %142 = arith.addf %0, %141 : vector<8x128xf32>
    %143 = math.absf %142 : vector<8x128xf32>
    %144 = vector.broadcast %138 : f32 to vector<8x128xf32>
    %145 = arith.mulf %144, %143 : vector<8x128xf32>
    %146 = arith.addf %136, %145 : vector<8x128xf32>
    %c14_i32 = arith.constant 14 : i32
    %147 = arith.index_cast %c14_i32 : i32 to index
    %148 = memref.load %arg2[%147] : memref<32xf32, #tpu.memory_space<smem>>
    %149 = arith.index_cast %c14_i32 : i32 to index
    %150 = memref.load %arg3[%149] : memref<32xf32, #tpu.memory_space<smem>>
    %151 = vector.broadcast %150 : f32 to vector<8x128xf32>
    %152 = arith.addf %0, %151 : vector<8x128xf32>
    %153 = math.absf %152 : vector<8x128xf32>
    %154 = vector.broadcast %148 : f32 to vector<8x128xf32>
    %155 = arith.mulf %154, %153 : vector<8x128xf32>
    %156 = arith.addf %146, %155 : vector<8x128xf32>
    %c15_i32 = arith.constant 15 : i32
    %157 = arith.index_cast %c15_i32 : i32 to index
    %158 = memref.load %arg2[%157] : memref<32xf32, #tpu.memory_space<smem>>
    %159 = arith.index_cast %c15_i32 : i32 to index
    %160 = memref.load %arg3[%159] : memref<32xf32, #tpu.memory_space<smem>>
    %161 = vector.broadcast %160 : f32 to vector<8x128xf32>
    %162 = arith.addf %0, %161 : vector<8x128xf32>
    %163 = math.absf %162 : vector<8x128xf32>
    %164 = vector.broadcast %158 : f32 to vector<8x128xf32>
    %165 = arith.mulf %164, %163 : vector<8x128xf32>
    %166 = arith.addf %156, %165 : vector<8x128xf32>
    %c16_i32 = arith.constant 16 : i32
    %167 = arith.index_cast %c16_i32 : i32 to index
    %168 = memref.load %arg2[%167] : memref<32xf32, #tpu.memory_space<smem>>
    %169 = arith.index_cast %c16_i32 : i32 to index
    %170 = memref.load %arg3[%169] : memref<32xf32, #tpu.memory_space<smem>>
    %171 = vector.broadcast %170 : f32 to vector<8x128xf32>
    %172 = arith.addf %0, %171 : vector<8x128xf32>
    %173 = math.absf %172 : vector<8x128xf32>
    %174 = vector.broadcast %168 : f32 to vector<8x128xf32>
    %175 = arith.mulf %174, %173 : vector<8x128xf32>
    %176 = arith.addf %166, %175 : vector<8x128xf32>
    %c17_i32 = arith.constant 17 : i32
    %177 = arith.index_cast %c17_i32 : i32 to index
    %178 = memref.load %arg2[%177] : memref<32xf32, #tpu.memory_space<smem>>
    %179 = arith.index_cast %c17_i32 : i32 to index
    %180 = memref.load %arg3[%179] : memref<32xf32, #tpu.memory_space<smem>>
    %181 = vector.broadcast %180 : f32 to vector<8x128xf32>
    %182 = arith.addf %0, %181 : vector<8x128xf32>
    %183 = math.absf %182 : vector<8x128xf32>
    %184 = vector.broadcast %178 : f32 to vector<8x128xf32>
    %185 = arith.mulf %184, %183 : vector<8x128xf32>
    %186 = arith.addf %176, %185 : vector<8x128xf32>
    %c18_i32 = arith.constant 18 : i32
    %187 = arith.index_cast %c18_i32 : i32 to index
    %188 = memref.load %arg2[%187] : memref<32xf32, #tpu.memory_space<smem>>
    %189 = arith.index_cast %c18_i32 : i32 to index
    %190 = memref.load %arg3[%189] : memref<32xf32, #tpu.memory_space<smem>>
    %191 = vector.broadcast %190 : f32 to vector<8x128xf32>
    %192 = arith.addf %0, %191 : vector<8x128xf32>
    %193 = math.absf %192 : vector<8x128xf32>
    %194 = vector.broadcast %188 : f32 to vector<8x128xf32>
    %195 = arith.mulf %194, %193 : vector<8x128xf32>
    %196 = arith.addf %186, %195 : vector<8x128xf32>
    %c19_i32 = arith.constant 19 : i32
    %197 = arith.index_cast %c19_i32 : i32 to index
    %198 = memref.load %arg2[%197] : memref<32xf32, #tpu.memory_space<smem>>
    %199 = arith.index_cast %c19_i32 : i32 to index
    %200 = memref.load %arg3[%199] : memref<32xf32, #tpu.memory_space<smem>>
    %201 = vector.broadcast %200 : f32 to vector<8x128xf32>
    %202 = arith.addf %0, %201 : vector<8x128xf32>
    %203 = math.absf %202 : vector<8x128xf32>
    %204 = vector.broadcast %198 : f32 to vector<8x128xf32>
    %205 = arith.mulf %204, %203 : vector<8x128xf32>
    %206 = arith.addf %196, %205 : vector<8x128xf32>
    %c20_i32 = arith.constant 20 : i32
    %207 = arith.index_cast %c20_i32 : i32 to index
    %208 = memref.load %arg2[%207] : memref<32xf32, #tpu.memory_space<smem>>
    %209 = arith.index_cast %c20_i32 : i32 to index
    %210 = memref.load %arg3[%209] : memref<32xf32, #tpu.memory_space<smem>>
    %211 = vector.broadcast %210 : f32 to vector<8x128xf32>
    %212 = arith.addf %0, %211 : vector<8x128xf32>
    %213 = math.absf %212 : vector<8x128xf32>
    %214 = vector.broadcast %208 : f32 to vector<8x128xf32>
    %215 = arith.mulf %214, %213 : vector<8x128xf32>
    %216 = arith.addf %206, %215 : vector<8x128xf32>
    %c21_i32 = arith.constant 21 : i32
    %217 = arith.index_cast %c21_i32 : i32 to index
    %218 = memref.load %arg2[%217] : memref<32xf32, #tpu.memory_space<smem>>
    %219 = arith.index_cast %c21_i32 : i32 to index
    %220 = memref.load %arg3[%219] : memref<32xf32, #tpu.memory_space<smem>>
    %221 = vector.broadcast %220 : f32 to vector<8x128xf32>
    %222 = arith.addf %0, %221 : vector<8x128xf32>
    %223 = math.absf %222 : vector<8x128xf32>
    %224 = vector.broadcast %218 : f32 to vector<8x128xf32>
    %225 = arith.mulf %224, %223 : vector<8x128xf32>
    %226 = arith.addf %216, %225 : vector<8x128xf32>
    %c22_i32 = arith.constant 22 : i32
    %227 = arith.index_cast %c22_i32 : i32 to index
    %228 = memref.load %arg2[%227] : memref<32xf32, #tpu.memory_space<smem>>
    %229 = arith.index_cast %c22_i32 : i32 to index
    %230 = memref.load %arg3[%229] : memref<32xf32, #tpu.memory_space<smem>>
    %231 = vector.broadcast %230 : f32 to vector<8x128xf32>
    %232 = arith.addf %0, %231 : vector<8x128xf32>
    %233 = math.absf %232 : vector<8x128xf32>
    %234 = vector.broadcast %228 : f32 to vector<8x128xf32>
    %235 = arith.mulf %234, %233 : vector<8x128xf32>
    %236 = arith.addf %226, %235 : vector<8x128xf32>
    %c23_i32 = arith.constant 23 : i32
    %237 = arith.index_cast %c23_i32 : i32 to index
    %238 = memref.load %arg2[%237] : memref<32xf32, #tpu.memory_space<smem>>
    %239 = arith.index_cast %c23_i32 : i32 to index
    %240 = memref.load %arg3[%239] : memref<32xf32, #tpu.memory_space<smem>>
    %241 = vector.broadcast %240 : f32 to vector<8x128xf32>
    %242 = arith.addf %0, %241 : vector<8x128xf32>
    %243 = math.absf %242 : vector<8x128xf32>
    %244 = vector.broadcast %238 : f32 to vector<8x128xf32>
    %245 = arith.mulf %244, %243 : vector<8x128xf32>
    %246 = arith.addf %236, %245 : vector<8x128xf32>
    %c24_i32 = arith.constant 24 : i32
    %247 = arith.index_cast %c24_i32 : i32 to index
    %248 = memref.load %arg2[%247] : memref<32xf32, #tpu.memory_space<smem>>
    %249 = arith.index_cast %c24_i32 : i32 to index
    %250 = memref.load %arg3[%249] : memref<32xf32, #tpu.memory_space<smem>>
    %251 = vector.broadcast %250 : f32 to vector<8x128xf32>
    %252 = arith.addf %0, %251 : vector<8x128xf32>
    %253 = math.absf %252 : vector<8x128xf32>
    %254 = vector.broadcast %248 : f32 to vector<8x128xf32>
    %255 = arith.mulf %254, %253 : vector<8x128xf32>
    %256 = arith.addf %246, %255 : vector<8x128xf32>
    %c25_i32 = arith.constant 25 : i32
    %257 = arith.index_cast %c25_i32 : i32 to index
    %258 = memref.load %arg2[%257] : memref<32xf32, #tpu.memory_space<smem>>
    %259 = arith.index_cast %c25_i32 : i32 to index
    %260 = memref.load %arg3[%259] : memref<32xf32, #tpu.memory_space<smem>>
    %261 = vector.broadcast %260 : f32 to vector<8x128xf32>
    %262 = arith.addf %0, %261 : vector<8x128xf32>
    %263 = math.absf %262 : vector<8x128xf32>
    %264 = vector.broadcast %258 : f32 to vector<8x128xf32>
    %265 = arith.mulf %264, %263 : vector<8x128xf32>
    %266 = arith.addf %256, %265 : vector<8x128xf32>
    %c26_i32 = arith.constant 26 : i32
    %267 = arith.index_cast %c26_i32 : i32 to index
    %268 = memref.load %arg2[%267] : memref<32xf32, #tpu.memory_space<smem>>
    %269 = arith.index_cast %c26_i32 : i32 to index
    %270 = memref.load %arg3[%269] : memref<32xf32, #tpu.memory_space<smem>>
    %271 = vector.broadcast %270 : f32 to vector<8x128xf32>
    %272 = arith.addf %0, %271 : vector<8x128xf32>
    %273 = math.absf %272 : vector<8x128xf32>
    %274 = vector.broadcast %268 : f32 to vector<8x128xf32>
    %275 = arith.mulf %274, %273 : vector<8x128xf32>
    %276 = arith.addf %266, %275 : vector<8x128xf32>
    %c27_i32 = arith.constant 27 : i32
    %277 = arith.index_cast %c27_i32 : i32 to index
    %278 = memref.load %arg2[%277] : memref<32xf32, #tpu.memory_space<smem>>
    %279 = arith.index_cast %c27_i32 : i32 to index
    %280 = memref.load %arg3[%279] : memref<32xf32, #tpu.memory_space<smem>>
    %281 = vector.broadcast %280 : f32 to vector<8x128xf32>
    %282 = arith.addf %0, %281 : vector<8x128xf32>
    %283 = math.absf %282 : vector<8x128xf32>
    %284 = vector.broadcast %278 : f32 to vector<8x128xf32>
    %285 = arith.mulf %284, %283 : vector<8x128xf32>
    %286 = arith.addf %276, %285 : vector<8x128xf32>
    %c28_i32 = arith.constant 28 : i32
    %287 = arith.index_cast %c28_i32 : i32 to index
    %288 = memref.load %arg2[%287] : memref<32xf32, #tpu.memory_space<smem>>
    %289 = arith.index_cast %c28_i32 : i32 to index
    %290 = memref.load %arg3[%289] : memref<32xf32, #tpu.memory_space<smem>>
    %291 = vector.broadcast %290 : f32 to vector<8x128xf32>
    %292 = arith.addf %0, %291 : vector<8x128xf32>
    %293 = math.absf %292 : vector<8x128xf32>
    %294 = vector.broadcast %288 : f32 to vector<8x128xf32>
    %295 = arith.mulf %294, %293 : vector<8x128xf32>
    %296 = arith.addf %286, %295 : vector<8x128xf32>
    %c29_i32 = arith.constant 29 : i32
    %297 = arith.index_cast %c29_i32 : i32 to index
    %298 = memref.load %arg2[%297] : memref<32xf32, #tpu.memory_space<smem>>
    %299 = arith.index_cast %c29_i32 : i32 to index
    %300 = memref.load %arg3[%299] : memref<32xf32, #tpu.memory_space<smem>>
    %301 = vector.broadcast %300 : f32 to vector<8x128xf32>
    %302 = arith.addf %0, %301 : vector<8x128xf32>
    %303 = math.absf %302 : vector<8x128xf32>
    %304 = vector.broadcast %298 : f32 to vector<8x128xf32>
    %305 = arith.mulf %304, %303 : vector<8x128xf32>
    %306 = arith.addf %296, %305 : vector<8x128xf32>
    %c30_i32 = arith.constant 30 : i32
    %307 = arith.index_cast %c30_i32 : i32 to index
    %308 = memref.load %arg2[%307] : memref<32xf32, #tpu.memory_space<smem>>
    %309 = arith.index_cast %c30_i32 : i32 to index
    %310 = memref.load %arg3[%309] : memref<32xf32, #tpu.memory_space<smem>>
    %311 = vector.broadcast %310 : f32 to vector<8x128xf32>
    %312 = arith.addf %0, %311 : vector<8x128xf32>
    %313 = math.absf %312 : vector<8x128xf32>
    %314 = vector.broadcast %308 : f32 to vector<8x128xf32>
    %315 = arith.mulf %314, %313 : vector<8x128xf32>
    %316 = arith.addf %306, %315 : vector<8x128xf32>
    %c31_i32 = arith.constant 31 : i32
    %317 = arith.index_cast %c31_i32 : i32 to index
    %318 = memref.load %arg2[%317] : memref<32xf32, #tpu.memory_space<smem>>
    %319 = arith.index_cast %c31_i32 : i32 to index
    %320 = memref.load %arg3[%319] : memref<32xf32, #tpu.memory_space<smem>>
    %321 = vector.broadcast %320 : f32 to vector<8x128xf32>
    %322 = arith.addf %0, %321 : vector<8x128xf32>
    %323 = math.absf %322 : vector<8x128xf32>
    %324 = vector.broadcast %318 : f32 to vector<8x128xf32>
    %325 = arith.mulf %324, %323 : vector<8x128xf32>
    %326 = arith.addf %316, %325 : vector<8x128xf32>
    %c32_i32 = arith.constant 32 : i32
    %cst = arith.constant 0.000000e+00 : f32
    %327 = vector.broadcast %cst : f32 to vector<8x128xf32>
    %328 = arith.subf %327, %326 : vector<8x128xf32>
    %329 = math.exp %328 : vector<8x128xf32>
    %cst_2 = arith.constant 1.000000e+00 : f32
    %330 = vector.broadcast %cst_2 : f32 to vector<8x128xf32>
    %331 = arith.addf %330, %329 : vector<8x128xf32>
    %332 = tpu.reciprocal %331 : vector<8x128xf32> -> vector<8x128xf32>
    %333 = arith.mulf %0, %332 : vector<8x128xf32>
    %c0_3 = arith.constant 0 : index
    %c0_4 = arith.constant 0 : index
    %334 = vector.load %arg5[%c0_3, %c0_4] : memref<8x128xf32, #tpu.memory_space<vmem>>, vector<8x128xf32>
    tpu.vector_store %arg5[%c0_3, %c0_4], %333 {strides = array<i32>} : memref<8x128xf32, #tpu.memory_space<vmem>>, vector<8x128xf32>,
    return
  }
  func.func @transform_0(%arg0: i32) -> (i32, i32) {
    %c0_i32 = arith.constant 0 : i32
    %c0_i32_0 = arith.constant 0 : i32
    return %arg0, %c0_i32 : i32, i32
  }
  func.func @transform_1(%arg0: i32) -> i32 {
    %c0_i32 = arith.constant 0 : i32
    %c0_i32_0 = arith.constant 0 : i32
    return %c0_i32 : i32
  }
  func.func @transform_2(%arg0: i32) -> i32 {
    %c0_i32 = arith.constant 0 : i32
    %c0_i32_0 = arith.constant 0 : i32
    return %c0_i32 : i32
  }
  func.func @transform_3(%arg0: i32) -> i32 {
    %c0_i32 = arith.constant 0 : i32
    %c0_i32_0 = arith.constant 0 : i32
    return %c0_i32 : i32
  }
  func.func @transform_4(%arg0: i32) -> (i32, i32) {
    %c0_i32 = arith.constant 0 : i32
    %c0_i32_0 = arith.constant 0 : i32
    return %arg0, %c0_i32 : i32, i32
  }
}

</mosaic_0001>

<llo_original>
// kernel: tpu_custom_call.1
$region0: #{tpu_custom_call.1}
  #allocation0 [shape = 'u32[]', space=smem, size = 0x4, offset = 0x4, fixed_abs, tag = 'smem constant byte address 0x4 - core index']
  #allocation1 [shape = 'u32[144,128]{1,0:T(1,128)}', space=vmem, size = 0x12000, scoped, tag = 'internal scratch']
  %s0 = inlined_call_operand.hbm [shape: f32[8,128], index: 0, kind: input, shape index: {}]
  %s1 = inlined_call_operand.vmem [shape: f32[32], index: 1, kind: input, shape index: {}]
  %s2 = inlined_call_operand.vmem [shape: f32[32], index: 2, kind: input, shape index: {}]
  %s3 = inlined_call_operand.vmem [shape: f32[2], index: 3, kind: input, shape index: {}]
  %s4 = inlined_call_operand.hbm [shape: f32[8,128], index: 4, kind: output, shape index: {}]
  %s5 = sld [smem:[#allocation0]]
  $region42: #{tpu_custom_call.1} parent=0
    _
  %s7 = ssub.s32 1, %s5
  %s8 = scalar_select 0, %s7, %s5
  $region1: #{tpu_custom_call.1} parent=0
    #allocation2 [shape = 'u8[4096]{0}', space=vmem, size = 0x1000, scoped, tag = 'input window, operand 0, single buffered']
    #allocation3 [shape = 's32[1]{0}', space=sflag, size = 0x4, scoped, tag = 'scoped memory for tpu_custom_call.1']
    #allocation4 [shape = 's32[1]{0}', space=sflag, size = 0x4, scoped, tag = 'scoped memory for tpu_custom_call.1']
    #allocation5 [shape = 's32[1]{0}', space=sflag, size = 0x4, scoped, tag = 'scoped memory for tpu_custom_call.1']
    #allocation6 [shape = 'u8[512]{0}', space=smem, size = 0x200, scoped, tag = 'input window, operand 1, single buffered']
    #allocation7 [shape = 'u8[512]{0}', space=smem, size = 0x200, scoped, tag = 'input window, operand 2, single buffered']
    #allocation8 [shape = 's32[1]{0}', space=sflag, size = 0x4, scoped, tag = 'scoped memory for tpu_custom_call.1']
    #allocation9 [shape = 'u8[512]{0}', space=smem, size = 0x200, scoped, tag = 'input window, operand 3, single buffered']
    #allocation10 [shape = 'u8[4096]{0}', space=vmem, size = 0x1000, scoped, tag = 'output window, operand 0, single buffered']
    %9 = vsyncpa [#allocation3], 0
    %10 = vsyncpa [#allocation5], 0
    %11 = vsyncpa [#allocation8], 0
    %12 = vsyncpa [#allocation4], 0
    // Predicated region
    $region2: #{tpu_custom_call.1} parent=1 // pred_check
      _
    $region3: #{tpu_custom_call.1} parent=1 // pred_check_branch
      %14 = sbr.rel (0) target = $region5
    $region4: #{tpu_custom_call.1} parent=1 // pred_region
      %s16 = ssub.s32 128, 128
      %17 = vsyncadd [#allocation3], %s16
      %s19 = sshll.u32 [#allocation2], 4
      %s20 = int_to_ptr.vmem [resolvable:$true] %s19
      %22 = dma.hbm_to_vmem [thread:$0]  %s0, 128, %s20, [#allocation3]
    $region5: #{tpu_custom_call.1} parent=1 // pred_fallthru
      _
    // Predicated region
    $region6: #{tpu_custom_call.1} parent=1 // pred_check
      _
    $region7: #{tpu_custom_call.1} parent=1 // pred_check_branch
      %24 = sbr.rel (0) target = $region9
    $region8: #{tpu_custom_call.1} parent=1 // pred_region
      %s26 = ssub.s32 16, 16
      %27 = vsyncadd [#allocation5], %s26
      %s29 = sshll.u32 %s1, 4
      %s30 = int_to_ptr.vmem [resolvable:$true] %s29
      %32 = dma.vmem_to_smem %s30, 16, [#allocation6], [#allocation5]
    $region9: #{tpu_custom_call.1} parent=1 // pred_fallthru
      _
    // Predicated region
    $region10: #{tpu_custom_call.1} parent=1 // pred_check
      _
    $region11: #{tpu_custom_call.1} parent=1 // pred_check_branch
      %34 = sbr.rel (0) target = $region13
    $region12: #{tpu_custom_call.1} parent=1 // pred_region
      %s36 = ssub.s32 16, 16
      %37 = vsyncadd [#allocation8], %s36
      %s39 = sshll.u32 %s2, 4
      %s40 = int_to_ptr.vmem [resolvable:$true] %s39
      %42 = dma.vmem_to_smem %s40, 16, [#allocation7], [#allocation8]
    $region13: #{tpu_custom_call.1} parent=1 // pred_fallthru
      _
    // Predicated region
    $region14: #{tpu_custom_call.1} parent=1 // pred_check
      _
    $region15: #{tpu_custom_call.1} parent=1 // pred_check_branch
      %44 = sbr.rel (0) target = $region17
    $region16: #{tpu_custom_call.1} parent=1 // pred_region
      %s46 = ssub.s32 16, 16
      %47 = vsyncadd [#allocation8], %s46
      %s49 = sshll.u32 %s3, 4
      %s50 = int_to_ptr.vmem [resolvable:$true] %s49
      %52 = dma.vmem_to_smem %s50, 16, [#allocation9], [#allocation8]
    $region17: #{tpu_custom_call.1} parent=1 // pred_fallthru
      _
    // Predicated region
    $region18: #{tpu_custom_call.1} parent=1 // pred_check
      _
    $region19: #{tpu_custom_call.1} parent=1 // pred_check_branch
      %54 = sbr.rel (0) target = $region21
    $region20: #{tpu_custom_call.1} parent=1 // pred_region
      %55 = dma.done [#allocation3], 128
    $region21: #{tpu_custom_call.1} parent=1 // pred_fallthru
      _
    // Predicated region
    $region22: #{tpu_custom_call.1} parent=1 // pred_check
      _
    $region23: #{tpu_custom_call.1} parent=1 // pred_check_branch
      %57 = sbr.rel (0) target = $region25
    $region24: #{tpu_custom_call.1} parent=1 // pred_region
      %58 = dma.done [#allocation5], 16
    $region25: #{tpu_custom_call.1} parent=1 // pred_fallthru
      _
    // Predicated region
    $region26: #{tpu_custom_call.1} parent=1 // pred_check
      _
    $region27: #{tpu_custom_call.1} parent=1 // pred_check_branch
      %60 = sbr.rel (0) target = $region29
    $region28: #{tpu_custom_call.1} parent=1 // pred_region
      %61 = dma.done [#allocation8], 16
    $region29: #{tpu_custom_call.1} parent=1 // pred_fallthru
      _
    // Predicated region
    $region30: #{tpu_custom_call.1} parent=1 // pred_check
      _
    $region31: #{tpu_custom_call.1} parent=1 // pred_check_branch
      %63 = sbr.rel (0) target = $region33
    $region32: #{tpu_custom_call.1} parent=1 // pred_region
      %64 = dma.done [#allocation8], 16
    $region33: #{tpu_custom_call.1} parent=1 // pred_fallthru
      _
    %65 = sfence
    %v66 = vld [vmem:[#allocation2] sm:$0xff]
    %s67 = sld [smem:[#allocation9]]
    %v68 = vstv %s67
    %v69 = vmul.f32 %v68, %v66
    %s70 = sld [smem:[#allocation9 + $0x1]]
    %v71 = vstv %s70
    %v72 = vadd.f32 %v69, %v71
    %s73 = sld [smem:[#allocation6]]
    %s74 = sld [smem:[#allocation7]]
    %v75 = vstv %s74
    %v76 = vadd.f32 %v66, %v75
    %v77 = vand.u32 2147483647, %v76
    %v78 = vstv %s73
    %v79 = vmul.f32 %v78, %v77
    %v80 = vadd.f32 %v72, %v79
    %s81 = sld [smem:[#allocation6 + $0x1]]
    %s82 = sld [smem:[#allocation7 + $0x1]]
    %v83 = vstv %s82
    %v84 = vadd.f32 %v66, %v83
    %v85 = vand.u32 2147483647, %v84
    %v86 = vstv %s81
    %v87 = vmul.f32 %v86, %v85
    %v88 = vadd.f32 %v80, %v87
    %s89 = sld [smem:[#allocation6 + $0x2]]
    %s90 = sld [smem:[#allocation7 + $0x2]]
    %v91 = vstv %s90
    %v92 = vadd.f32 %v66, %v91
    %v93 = vand.u32 2147483647, %v92
    %v94 = vstv %s89
    %v95 = vmul.f32 %v94, %v93
    %v96 = vadd.f32 %v88, %v95
    %s97 = sld [smem:[#allocation6 + $0x3]]
    %s98 = sld [smem:[#allocation7 + $0x3]]
    %v99 = vstv %s98
    %v100 = vadd.f32 %v66, %v99
    %v101 = vand.u32 2147483647, %v100
    %v102 = vstv %s97
    %v103 = vmul.f32 %v102, %v101
    %v104 = vadd.f32 %v96, %v103
    %s105 = sld [smem:[#allocation6 + $0x4]]
    %s106 = sld [smem:[#allocation7 + $0x4]]
    %v107 = vstv %s106
    %v108 = vadd.f32 %v66, %v107
    %v109 = vand.u32 2147483647, %v108
    %v110 = vstv %s105
    %v111 = vmul.f32 %v110, %v109
    %v112 = vadd.f32 %v104, %v111
    %s113 = sld [smem:[#allocation6 + $0x5]]
    %s114 = sld [smem:[#allocation7 + $0x5]]
    %v115 = vstv %s114
    %v116 = vadd.f32 %v66, %v115
    %v117 = vand.u32 2147483647, %v116
    %v118 = vstv %s113
    %v119 = vmul.f32 %v118, %v117
    %v120 = vadd.f32 %v112, %v119
    %s121 = sld [smem:[#allocation6 + $0x6]]
    %s122 = sld [smem:[#allocation7 + $0x6]]
    %v123 = vstv %s122
    %v124 = vadd.f32 %v66, %v123
    %v125 = vand.u32 2147483647, %v124
    %v126 = vstv %s121
    %v127 = vmul.f32 %v126, %v125
    %v128 = vadd.f32 %v120, %v127
    %s129 = sld [smem:[#allocation6 + $0x7]]
    %s130 = sld [smem:[#allocation7 + $0x7]]
    %v131 = vstv %s130
    %v132 = vadd.f32 %v66, %v131
    %v133 = vand.u32 2147483647, %v132
    %v134 = vstv %s129
    %v135 = vmul.f32 %v134, %v133
    %v136 = vadd.f32 %v128, %v135
    %s137 = sld [smem:[#allocation6 + $0x8]]
    %s138 = sld [smem:[#allocation7 + $0x8]]
    %v139 = vstv %s138
    %v140 = vadd.f32 %v66, %v139
    %v141 = vand.u32 2147483647, %v140
    %v142 = vstv %s137
    %v143 = vmul.f32 %v142, %v141
    %v144 = vadd.f32 %v136, %v143
    %s145 = sld [smem:[#allocation6 + $0x9]]
    %s146 = sld [smem:[#allocation7 + $0x9]]
    %v147 = vstv %s146
    %v148 = vadd.f32 %v66, %v147
    %v149 = vand.u32 2147483647, %v148
    %v150 = vstv %s145
    %v151 = vmul.f32 %v150, %v149
    %v152 = vadd.f32 %v144, %v151
    %s153 = sld [smem:[#allocation6 + $0xa]]
    %s154 = sld [smem:[#allocation7 + $0xa]]
    %v155 = vstv %s154
    %v156 = vadd.f32 %v66, %v155
    %v157 = vand.u32 2147483647, %v156
    %v158 = vstv %s153
    %v159 = vmul.f32 %v158, %v157
    %v160 = vadd.f32 %v152, %v159
    %s161 = sld [smem:[#allocation6 + $0xb]]
    %s162 = sld [smem:[#allocation7 + $0xb]]
    %v163 = vstv %s162
    %v164 = vadd.f32 %v66, %v163
    %v165 = vand.u32 2147483647, %v164
    %v166 = vstv %s161
    %v167 = vmul.f32 %v166, %v165
    %v168 = vadd.f32 %v160, %v167
    %s169 = sld [smem:[#allocation6 + $0xc]]
    %s170 = sld [smem:[#allocation7 + $0xc]]
    %v171 = vstv %s170
    %v172 = vadd.f32 %v66, %v171
    %v173 = vand.u32 2147483647, %v172
    %v174 = vstv %s169
    %v175 = vmul.f32 %v174, %v173
    %v176 = vadd.f32 %v168, %v175
    %s177 = sld [smem:[#allocation6 + $0xd]]
    %s178 = sld [smem:[#allocation7 + $0xd]]
    %v179 = vstv %s178
    %v180 = vadd.f32 %v66, %v179
    %v181 = vand.u32 2147483647, %v180
    %v182 = vstv %s177
    %v183 = vmul.f32 %v182, %v181
    %v184 = vadd.f32 %v176, %v183
    %s185 = sld [smem:[#allocation6 + $0xe]]
    %s186 = sld [smem:[#allocation7 + $0xe]]
    %v187 = vstv %s186
    %v188 = vadd.f32 %v66, %v187
    %v189 = vand.u32 2147483647, %v188
    %v190 = vstv %s185
    %v191 = vmul.f32 %v190, %v189
    %v192 = vadd.f32 %v184, %v191
    %s193 = sld [smem:[#allocation6 + $0xf]]
    %s194 = sld [smem:[#allocation7 + $0xf]]
    %v195 = vstv %s194
    %v196 = vadd.f32 %v66, %v195
    %v197 = vand.u32 2147483647, %v196
    %v198 = vstv %s193
    %v199 = vmul.f32 %v198, %v197
    %v200 = vadd.f32 %v192, %v199
    %s201 = sld [smem:[#allocation6 + $0x10]]
    %s202 = sld [smem:[#allocation7 + $0x10]]
    %v203 = vstv %s202
    %v204 = vadd.f32 %v66, %v203
    %v205 = vand.u32 2147483647, %v204
    %v206 = vstv %s201
    %v207 = vmul.f32 %v206, %v205
    %v208 = vadd.f32 %v200, %v207
    %s209 = sld [smem:[#allocation6 + $0x11]]
    %s210 = sld [smem:[#allocation7 + $0x11]]
    %v211 = vstv %s210
    %v212 = vadd.f32 %v66, %v211
    %v213 = vand.u32 2147483647, %v212
    %v214 = vstv %s209
    %v215 = vmul.f32 %v214, %v213
    %v216 = vadd.f32 %v208, %v215
    %s217 = sld [smem:[#allocation6 + $0x12]]
    %s218 = sld [smem:[#allocation7 + $0x12]]
    %v219 = vstv %s218
    %v220 = vadd.f32 %v66, %v219
    %v221 = vand.u32 2147483647, %v220
    %v222 = vstv %s217
    %v223 = vmul.f32 %v222, %v221
    %v224 = vadd.f32 %v216, %v223
    %s225 = sld [smem:[#allocation6 + $0x13]]
    %s226 = sld [smem:[#allocation7 + $0x13]]
    %v227 = vstv %s226
    %v228 = vadd.f32 %v66, %v227
    %v229 = vand.u32 2147483647, %v228
    %v230 = vstv %s225
    %v231 = vmul.f32 %v230, %v229
    %v232 = vadd.f32 %v224, %v231
    %s233 = sld [smem:[#allocation6 + $0x14]]
    %s234 = sld [smem:[#allocation7 + $0x14]]
    %v235 = vstv %s234
    %v236 = vadd.f32 %v66, %v235
    %v237 = vand.u32 2147483647, %v236
    %v238 = vstv %s233
    %v239 = vmul.f32 %v238, %v237
    %v240 = vadd.f32 %v232, %v239
    %s241 = sld [smem:[#allocation6 + $0x15]]
    %s242 = sld [smem:[#allocation7 + $0x15]]
    %v243 = vstv %s242
    %v244 = vadd.f32 %v66, %v243
    %v245 = vand.u32 2147483647, %v244
    %v246 = vstv %s241
    %v247 = vmul.f32 %v246, %v245
    %v248 = vadd.f32 %v240, %v247
    %s249 = sld [smem:[#allocation6 + $0x16]]
    %s250 = sld [smem:[#allocation7 + $0x16]]
    %v251 = vstv %s250
    %v252 = vadd.f32 %v66, %v251
    %v253 = vand.u32 2147483647, %v252
    %v254 = vstv %s249
    %v255 = vmul.f32 %v254, %v253
    %v256 = vadd.f32 %v248, %v255
    %s257 = sld [smem:[#allocation6 + $0x17]]
    %s258 = sld [smem:[#allocation7 + $0x17]]
    %v259 = vstv %s258
    %v260 = vadd.f32 %v66, %v259
    %v261 = vand.u32 2147483647, %v260
    %v262 = vstv %s257
    %v263 = vmul.f32 %v262, %v261
    %v264 = vadd.f32 %v256, %v263
    %s265 = sld [smem:[#allocation6 + $0x18]]
    %s266 = sld [smem:[#allocation7 + $0x18]]
    %v267 = vstv %s266
    %v268 = vadd.f32 %v66, %v267
    %v269 = vand.u32 2147483647, %v268
    %v270 = vstv %s265
    %v271 = vmul.f32 %v270, %v269
    %v272 = vadd.f32 %v264, %v271
    %s273 = sld [smem:[#allocation6 + $0x19]]
    %s274 = sld [smem:[#allocation7 + $0x19]]
    %v275 = vstv %s274
    %v276 = vadd.f32 %v66, %v275
    %v277 = vand.u32 2147483647, %v276
    %v278 = vstv %s273
    %v279 = vmul.f32 %v278, %v277
    %v280 = vadd.f32 %v272, %v279
    %s281 = sld [smem:[#allocation6 + $0x1a]]
    %s282 = sld [smem:[#allocation7 + $0x1a]]
    %v283 = vstv %s282
    %v284 = vadd.f32 %v66, %v283
    %v285 = vand.u32 2147483647, %v284
    %v286 = vstv %s281
    %v287 = vmul.f32 %v286, %v285
    %v288 = vadd.f32 %v280, %v287
    %s289 = sld [smem:[#allocation6 + $0x1b]]
    %s290 = sld [smem:[#allocation7 + $0x1b]]
    %v291 = vstv %s290
    %v292 = vadd.f32 %v66, %v291
    %v293 = vand.u32 2147483647, %v292
    %v294 = vstv %s289
    %v295 = vmul.f32 %v294, %v293
    %v296 = vadd.f32 %v288, %v295
    %s297 = sld [smem:[#allocation6 + $0x1c]]
    %s298 = sld [smem:[#allocation7 + $0x1c]]
    %v299 = vstv %s298
    %v300 = vadd.f32 %v66, %v299
    %v301 = vand.u32 2147483647, %v300
    %v302 = vstv %s297
    %v303 = vmul.f32 %v302, %v301
    %v304 = vadd.f32 %v296, %v303
    %s305 = sld [smem:[#allocation6 + $0x1d]]
    %s306 = sld [smem:[#allocation7 + $0x1d]]
    %v307 = vstv %s306
    %v308 = vadd.f32 %v66, %v307
    %v309 = vand.u32 2147483647, %v308
    %v310 = vstv %s305
    %v311 = vmul.f32 %v310, %v309
    %v312 = vadd.f32 %v304, %v311
    %s313 = sld [smem:[#allocation6 + $0x1e]]
    %s314 = sld [smem:[#allocation7 + $0x1e]]
    %v315 = vstv %s314
    %v316 = vadd.f32 %v66, %v315
    %v317 = vand.u32 2147483647, %v316
    %v318 = vstv %s313
    %v319 = vmul.f32 %v318, %v317
    %v320 = vadd.f32 %v312, %v319
    %s321 = sld [smem:[#allocation6 + $0x1f]]
    %s322 = sld [smem:[#allocation7 + $0x1f]]
    %v323 = vstv %s322
    %v324 = vadd.f32 %v66, %v323
    %v325 = vand.u32 2147483647, %v324
    %v326 = vstv %s321
    %v327 = vmul.f32 %v326, %v325
    %v328 = vadd.f32 %v320, %v327
    %v329 = vsub.f32 0.0, %v328
    %v330 = vmul.f32 %v329, 1.442695
    %v331 = vpow.pop %v330
    %v332 = vadd.f32 %v331, 1.0
    %v333 = vrcp.pop %v332
    %v334 = vmul.f32 %v66, %v333
    %335 = vst [vmem:[#allocation10] sm:$0xff] %v334
    // Predicated region
    $region34: #{tpu_custom_call.1} parent=1 // pred_check
      _
    $region35: #{tpu_custom_call.1} parent=1 // pred_check_branch
      %337 = sbr.rel (0) target = $region37
    $region36: #{tpu_custom_call.1} parent=1 // pred_region
      %s339 = ssub.s32 128, 128
      %340 = vsyncadd [#allocation4], %s339
      %s342 = sshll.u32 [#allocation10], 4
      %s343 = int_to_ptr.vmem [resolvable:$true] %s342
      %345 = dma.vmem_to_hbm [thread:$0]  %s343, 128, %s4, [#allocation4]
    $region37: #{tpu_custom_call.1} parent=1 // pred_fallthru
      _
    // Predicated region
    $region38: #{tpu_custom_call.1} parent=1 // pred_check
      _
    $region39: #{tpu_custom_call.1} parent=1 // pred_check_branch
      %347 = sbr.rel (0) target = $region41
    $region40: #{tpu_custom_call.1} parent=1 // pred_region
      %348 = dma.done [#allocation4], 128
    $region41: #{tpu_custom_call.1} parent=1 // pred_fallthru
      _
    %349 = vsyncpa [#allocation3], 1
    %350 = vsyncpa [#allocation4], 1
    %351 = vsyncpa [#allocation5], 1
    %352 = vsyncpa [#allocation8], 1

</llo_original>
